<compile_context>
chip_gen: v6e
topology: v6e:2x2x1
jax: 0.10.0
libtpu: 0.0.40
codegen_flags: <defaults>
</compile_context>

<pallas_src>
import functools

import jax
import jax.numpy as jnp
from jax import lax
from jax.experimental import pallas as pl
from jax.experimental.pallas import tpu as pltpu


# ------------------------------ in-kernel helpers ----------------------------

def _gram_flat(x_f32, n2):
    """view(x) @ view(x)^T for a (tb, n2*n2) f32 slab, returned lane-dense."""
    tb = x_f32.shape[0]
    x3 = x_f32.reshape(tb, n2, n2)
    # matrix_type == 'psd': batched x @ x^T.  Contract the LAST dims of both
    # operands so the MXU consumes the "transposed" operand natively (no XLU
    # transpose pass).  Operands stay f32: the gram is a tiny FLOP fraction and
    # f32 keeps the eigh input accurate.  The reference's 0.5*(g + g^T) is an
    # exact no-op: g[i,j] and g[j,i] are the same products summed in the same
    # order, so g is bitwise symmetric.
    # TODO(synk): merged (tb*n2, n2)@(n2, tb*n2) single-MXU-pass gram + block-diag
    #             extraction is a possible further win; adopt only after a bundle
    #             dump confirms this batched dot_general lowers to tb serial passes.
    g = lax.dot_general(x3, x3,
                        dimension_numbers=(((2,), (2,)), ((0,), (0,))),
                        preferred_element_type=jnp.float32)
    return g.reshape(tb, n2 * n2)


# -------------------------------- kernels ------------------------------------

def _nc_single_step_kernel(z_ref, w_ref, b_ref, o_ref, *, n2):
    """Fast path: full Din/Dout per step, W resident in VMEM across batch tiles.

    No K grid axis -> no accumulator scratch, no pl.when gating, no per-step
    f32 read-modify-write.  bf16 MXU operands (cast in-kernel), f32 accumulation.
    """
    x = jnp.dot(z_ref[...].astype(jnp.bfloat16),
                w_ref[...].astype(jnp.bfloat16),
                preferred_element_type=jnp.float32) + b_ref[...]
    o_ref[...] = _gram_flat(x, n2)


def _nc_tiled_kernel(z_ref, w_ref, b_ref, o_ref, acc_ref, *, n2, tn):
    """General path: grid = (batch, Dout tiles, K tiles), reduction axis last.

    A (tb, Dout) f32 accumulator stays resident in VMEM scratch across the
    (ni, ki) axes; bias is folded into its init; the gram runs once per batch
    tile in the finalize.
    """
    ni = pl.program_id(1)
    ki = pl.program_id(2)
    tb = acc_ref.shape[0]
    col = pl.multiple_of(ni * tn, tn)

    @pl.when(ki == 0)
    def _init():
        # Fold the bias into accumulator init -> no epilogue add.
        acc_ref[:, pl.ds(col, tn)] = jnp.broadcast_to(b_ref[...], (tb, tn))

    acc_ref[:, pl.ds(col, tn)] += jnp.dot(
        z_ref[...].astype(jnp.bfloat16),
        w_ref[...].astype(jnp.bfloat16),
        preferred_element_type=jnp.float32)

    @pl.when(jnp.logical_and(ni == pl.num_programs(1) - 1,
                             ki == pl.num_programs(2) - 1))
    def _finalize():
        o_ref[...] = _gram_flat(acc_ref[...], n2)


# ------------------------------ tiling helpers --------------------------------

def _vmem_capacity_bytes():
    try:
        return int(pltpu.get_tpu_info().vmem_capacity_bytes)
    except Exception:
        return 64 * 1024 * 1024   # conservative: v7x per-TC physical VMEM


def _pick_batch_tile(B):
    # Prefer large, sublane-aligned batch tiles, but keep >= 2 batch-grid steps
    # when B allows so v7x's two TensorCores both get work.
    for cand in (256, 128, 64, 32, 16, 8):
        if B % cand == 0 and B // cand >= 2:
            return cand
    for cand in (256, 128, 64, 32, 16, 8):
        if B % cand == 0:
            return cand
    return B


def _pick_dim_tile(dim, pref=512):
    if dim <= pref:
        return dim
    for cand in (pref, 256, 128):
        if dim % cand == 0:
            return cand
    return dim


# -------------------------------- wrapper -------------------------------------

def psd_from_net(z, W, b, n, *, tb=None, tk=None, tn=None, force_tiled=False):
    """Fused kernel producing the symmetric PSD matrix view(z@W+b) @ view(...)^T."""
    B, Din = z.shape
    n2 = n * n
    Dout = n2 * n2
    assert W.shape == (Din, Dout) and b.shape == (1, Dout)

    cap = _vmem_capacity_bytes()
    budget = int(0.72 * cap)      # leave Mosaic internal-scratch headroom

    if tb is None:
        tb = _pick_batch_tile(B)
    assert B % tb == 0 and (tb % 8 == 0 or tb == B), (B, tb)

    # Gram-phase temps (x view, g, casts) common to both paths — counted generously.
    gram_tmp = 3 * tb * Dout * 4

    # ---------------- fast path: W resident, single step per batch tile -------
    fast_bytes = (2 * Din * Dout * 4      # W (counted double-buffered; constant map)
                  + 2 * tb * Din * 4      # z tiles (double-buffered)
                  + 2 * Dout * 4          # bias
                  + 2 * tb * Dout * 4     # output tiles (double-buffered)
                  + gram_tmp)
    use_fast = (not force_tiled) and fast_bytes <= budget

    if use_fast:
        grid = (B // tb,)
        kernel = functools.partial(_nc_single_step_kernel, n2=n2)
        in_specs = [
            pl.BlockSpec((tb, Din), lambda bi: (bi, 0)),    # z
            pl.BlockSpec((Din, Dout), lambda bi: (0, 0)),   # W: DMA'd once, resident
            pl.BlockSpec((1, Dout), lambda bi: (0, 0)),     # bias
        ]
        out_specs = pl.BlockSpec((tb, Dout), lambda bi: (bi, 0))
        scratch_shapes = []
        semantics = ("parallel",)
        vmem_need = fast_bytes
        bytes_accessed = B * Din * 4 + Din * Dout * 4 + Dout * 4 + B * Dout * 4
    else:
        # ------------- general path: (batch, Dout tiles, K tiles) grid --------
        tk = _pick_dim_tile(Din) if tk is None else tk
        tn = _pick_dim_tile(Dout) if tn is None else tn
        assert Din % tk == 0 and (tk % 128 == 0 or tk == Din), (Din, tk)
        assert Dout % tn == 0 and (tn % 128 == 0 or tn == Dout), (Dout, tn)
        grid = (B // tb, Dout // tn, Din // tk)
        kernel = functools.partial(_nc_tiled_kernel, n2=n2, tn=tn)
        in_specs = [
            pl.BlockSpec((tb, tk), lambda bi, ni, ki: (bi, ki)),   # z
            pl.BlockSpec((tk, tn), lambda bi, ni, ki: (ki, ni)),   # W
            pl.BlockSpec((1, tn), lambda bi, ni, ki: (0, ni)),     # bias
        ]
        out_specs = pl.BlockSpec((tb, Dout), lambda bi, ni, ki: (bi, 0))
        scratch_shapes = [pltpu.VMEM((tb, Dout), jnp.float32)]
        semantics = ("parallel", "arbitrary", "arbitrary")
        vmem_need = (2 * tb * tk * 4 + 2 * tk * tn * 4 + 2 * tn * 4
                     + 2 * tb * Dout * 4 + tb * Dout * 4 + gram_tmp)
        bytes_accessed = (B * Din * 4 * (Dout // tn)       # z re-fetched per Dout tile
                          + Din * Dout * 4 * (B // tb)     # W streamed per batch tile
                          + Dout * 4 + B * Dout * 4)

    vmem_limit = int(min(max(int(1.4 * vmem_need), 16 * 1024 * 1024), budget))

    cost = pl.CostEstimate(
        flops=2 * B * Din * Dout + 2 * B * n2 * n2 * n2,
        transcendentals=0,
        bytes_accessed=int(bytes_accessed))

    # TODO(synk): on v7x an fp8 W operand would halve W traffic / VMEM; not adopted
    #             without validating downstream eigh accuracy (bf16 kept everywhere).
    g_flat = pl.pallas_call(
        kernel,
        out_shape=jax.ShapeDtypeStruct((B, Dout), jnp.float32),
        grid_spec=pltpu.PrefetchScalarGridSpec(
            num_scalar_prefetch=0,
            grid=grid,
            in_specs=in_specs,
            out_specs=out_specs,
            scratch_shapes=scratch_shapes),
        compiler_params=pltpu.CompilerParams(
            dimension_semantics=semantics,
            vmem_limit_bytes=vmem_limit),
        cost_estimate=cost,
    )(z.astype(jnp.float32), W.astype(jnp.float32), b.astype(jnp.float32))

    # Free layout plumbing: lane-dense kernel output -> (B, n^2, n^2) for eigh.
    return g_flat.reshape(B, n2, n2)


def generic_nc_forward(z, W, b, n):
    """GenericNC.forward with defaults: matrix_type='psd', width=-1, laplace=None."""
    x_sym = psd_from_net(z, W, b, n)
    # TODO(synk): width != -1 banded-diagonal reconstruction loop skipped (default width=-1).
    # TODO(synk): laplace branch (get_laplace) skipped; default laplace=None never calls it.
    # TODO(synk): wandb logging / forward_calls bookkeeping are host-side effects; skipped.
    # TODO(synk): method='exact' (EigenDecompositionFcn) source unavailable; using the
    #             method='pytorch' path (eigh of the symmetric matrix). Eigendecomposition
    #             has no clean Pallas equivalent, so it stays in plain JAX.
    _, y = jnp.linalg.eigh(x_sym)    # eigenvalues (unused), eigenvectors
    return y                         # forward returns y (eigenvectors)


# ----------------------------------- main --------------------------------------

if __name__ == "__main__":
    n = 4                       # matrices of size (n^2, n^2) = (16, 16)
    B = 2
    D_in = 32
    N = n * n
    D_out = N * N               # 256

    key = jax.random.PRNGKey(0)
    k_z, k_w, k_b = jax.random.split(key, 3)

    z = jax.random.normal(k_z, (B, D_in), dtype=jnp.float32)
    # Deterministic synthetic `net` (Linear) parameters.
    W = jax.random.normal(k_w, (D_in, D_out), dtype=jnp.float32) / jnp.sqrt(D_in)
    bias = jax.random.normal(k_b, (1, D_out), dtype=jnp.float32) * 0.01

    # --- fast path (resident W, single step per batch tile) -------------------
    x_sym = jax.block_until_ready(psd_from_net(z, W, bias, n))
    x_ref = (z @ W + bias).reshape(B, N, N)
    g_ref = jnp.einsum('bik,bjk->bij', x_ref, x_ref)
    rel = float(jnp.max(jnp.abs(x_sym - g_ref)) / (jnp.max(jnp.abs(g_ref)) + 1e-6))
    assert rel < 5e-2, f"fused kernel (fast path) mismatch: rel err {rel}"

    # --- general (tiled) path, forced with small tiles: grid = (2, 2, 2) ------
    B2, D_in2 = 16, 256
    k_z2, k_w2 = jax.random.split(k_b, 2)
    z2 = jax.random.normal(k_z2, (B2, D_in2), dtype=jnp.float32)
    W2 = jax.random.normal(k_w2, (D_in2, D_out), dtype=jnp.float32) / jnp.sqrt(D_in2)
    x2 = jax.block_until_ready(
        psd_from_net(z2, W2, bias, n, tb=8, tk=128, tn=128, force_tiled=True))
    x2_ref = (z2 @ W2 + bias).reshape(B2, N, N)
    g2_ref = jnp.einsum('bik,bjk->bij', x2_ref, x2_ref)
    rel2 = float(jnp.max(jnp.abs(x2 - g2_ref)) / (jnp.max(jnp.abs(g2_ref)) + 1e-6))
    assert rel2 < 5e-2, f"fused kernel (tiled path) mismatch: rel err {rel2}"

    # --- full GenericNC forward (gram kernel + eigh in plain JAX) --------------
    y = generic_nc_forward(z, W, bias, n)
    y = jax.block_until_ready(y)

    assert y.shape == (B, N, N), y.shape
    assert bool(jnp.all(jnp.isfinite(y)))
    print("KERNEL_OK")
</pallas_src>

<mosaic_0001>
module attributes {stable_mosaic.version = 11 : i64} {
  func.func @_nc_single_step_kernel(%arg0: i32, %arg1: memref<2x32xf32, #tpu.memory_space<vmem>>, %arg2: memref<32x256xf32, #tpu.memory_space<vmem>>, %arg3: memref<1x256xf32, #tpu.memory_space<vmem>>, %arg4: memref<2x256xf32, #tpu.memory_space<vmem>>) attributes {dimension_semantics = [#tpu.dimension_semantics<parallel>], iteration_bounds = array<i64: 1>, scalar_prefetch = 0 : i64, scratch_operands = 0 : i64, tpu.core_type = #tpu.core_type<tc>, window_params = [{transform_indices = @transform_0, window_bounds = array<i64: 2, 32>}, {pipeline_mode = #tpu.pipeline_mode<synchronous>, transform_indices = @transform_1, window_bounds = array<i64: 32, 256>}, {pipeline_mode = #tpu.pipeline_mode<synchronous>, transform_indices = @transform_2, window_bounds = array<i64: 1, 256>}, {transform_indices = @transform_3, window_bounds = array<i64: 2, 256>}]} {
    %c0 = arith.constant 0 : index
    %c0_0 = arith.constant 0 : index
    %0 = vector.load %arg1[%c0, %c0_0] : memref<2x32xf32, #tpu.memory_space<vmem>>, vector<2x32xf32>
    %1 = arith.truncf %0 : vector<2x32xf32> to vector<2x32xbf16>
    %c0_1 = arith.constant 0 : index
    %c0_2 = arith.constant 0 : index
    %2 = vector.load %arg2[%c0_1, %c0_2] : memref<32x256xf32, #tpu.memory_space<vmem>>, vector<32x256xf32>
    %3 = arith.truncf %2 : vector<32x256xf32> to vector<32x256xbf16>
    %cst = arith.constant dense<0.000000e+00> : vector<2x256xf32>
    %4 = tpu.matmul %1, %3, %cst {dimension_numbers = #tpu.dot_dimension_numbers<[1], [0], [0], [1], [0, 0, 1, 1], [], []>} : vector<2x32xbf16>, vector<32x256xbf16>, vector<2x256xf32> -> vector<2x256xf32>
    %c0_3 = arith.constant 0 : index
    %c0_4 = arith.constant 0 : index
    %5 = vector.load %arg3[%c0_3, %c0_4] : memref<1x256xf32, #tpu.memory_space<vmem>>, vector<1x256xf32>
    %6 = vector.broadcast %5 : vector<1x256xf32> to vector<2x256xf32>
    %7 = arith.addf %4, %6 : vector<2x256xf32>
    %8 = vector.shape_cast %7 : vector<2x256xf32> to vector<2x16x16xf32>
    %cst_5 = arith.constant dense<0.000000e+00> : vector<2x16x16xf32>
    %9 = tpu.matmul %8, %8, %cst_5 {dimension_numbers = #tpu.dot_dimension_numbers<[2], [2], [1], [1], [0, 0, 0, 1, 1, 1], [0], [0]>} : vector<2x16x16xf32>, vector<2x16x16xf32>, vector<2x16x16xf32> -> vector<2x16x16xf32>
    %10 = vector.shape_cast %9 : vector<2x16x16xf32> to vector<2x256xf32>
    %c0_6 = arith.constant 0 : index
    %c0_7 = arith.constant 0 : index
    %11 = vector.load %arg4[%c0_6, %c0_7] : memref<2x256xf32, #tpu.memory_space<vmem>>, vector<2x256xf32>
    tpu.vector_store %arg4[%c0_6, %c0_7], %10 {strides = array<i32>} : memref<2x256xf32, #tpu.memory_space<vmem>>, vector<2x256xf32>,
    return
  }
  func.func @transform_0(%arg0: i32) -> (i32, i32) {
    %c0_i32 = arith.constant 0 : i32
    %c0_i32_0 = arith.constant 0 : i32
    return %arg0, %c0_i32 : i32, i32
  }
  func.func @transform_1(%arg0: i32) -> (i32, i32) {
    %c0_i32 = arith.constant 0 : i32
    %c0_i32_0 = arith.constant 0 : i32
    %c0_i32_1 = arith.constant 0 : i32
    return %c0_i32, %c0_i32_0 : i32, i32
  }
  func.func @transform_2(%arg0: i32) -> (i32, i32) {
    %c0_i32 = arith.constant 0 : i32
    %c0_i32_0 = arith.constant 0 : i32
    %c0_i32_1 = arith.constant 0 : i32
    return %c0_i32, %c0_i32_0 : i32, i32
  }
  func.func @transform_3(%arg0: i32) -> (i32, i32) {
    %c0_i32 = arith.constant 0 : i32
    %c0_i32_0 = arith.constant 0 : i32
    return %arg0, %c0_i32 : i32, i32
  }
}

</mosaic_0001>

<llo_original>
// kernel: tpu_custom_call.1
$region0: #{tpu_custom_call.1}
  #allocation0 [shape = 'u32[]', space=smem, size = 0x4, offset = 0x4, fixed_abs, tag = 'smem constant byte address 0x4 - core index']
  #allocation1 [shape = 'u32[144,128]{1,0:T(1,128)}', space=vmem, size = 0x12000, scoped, tag = 'internal scratch']
  %s0 = inlined_call_operand.hbm [shape: f32[2,32], index: 0, kind: input, shape index: {}]
  %s1 = inlined_call_operand.hbm [shape: f32[32,256], index: 1, kind: input, shape index: {}]
  %s2 = inlined_call_operand.vmem [shape: f32[1,256], index: 2, kind: input, shape index: {}]
  %s3 = inlined_call_operand.hbm [shape: f32[2,256], index: 3, kind: output, shape index: {}]
  %s4 = sld [smem:[#allocation0]]
  $region30: #{tpu_custom_call.1} parent=0
    _
  %s6 = ssub.s32 1, %s4
  %s7 = scalar_select 0, %s6, %s4
  $region1: #{tpu_custom_call.1} parent=0
    #allocation2 [shape = 'u8[1024]{0}', space=vmem, size = 0x400, scoped, tag = 'input window, operand 0, single buffered']
    #allocation3 [shape = 's32[1]{0}', space=sflag, size = 0x4, scoped, tag = 'scoped memory for tpu_custom_call.1']
    #allocation4 [shape = 's32[1]{0}', space=sflag, size = 0x4, scoped, tag = 'scoped memory for tpu_custom_call.1']
    #allocation5 [shape = 'u8[32768]{0}', space=vmem, size = 0x8000, scoped, tag = 'input window, operand 1, single buffered']
    #allocation6 [shape = 's32[1]{0}', space=sflag, size = 0x4, scoped, tag = 'scoped memory for tpu_custom_call.1']
    #allocation7 [shape = 'u8[2048]{0}', space=vmem, size = 0x800, scoped, tag = 'output window, operand 0, single buffered']
    %8 = vsyncpa [#allocation3], 0
    %9 = vsyncpa [#allocation6], 0
    %10 = vsyncpa [#allocation4], 0
    // Predicated region
    $region2: #{tpu_custom_call.1} parent=1 // pred_check
      _
    $region3: #{tpu_custom_call.1} parent=1 // pred_check_branch
      %12 = sbr.rel (0) target = $region5
    $region4: #{tpu_custom_call.1} parent=1 // pred_region
      %s14 = ssub.s32 32, 32
      %15 = vsyncadd [#allocation3], %s14
      %s17 = sshll.u32 [#allocation2], 4
      %s18 = int_to_ptr.vmem [resolvable:$true] %s17
      %20 = dma.hbm_to_vmem [thread:$0]  %s0, 32, %s18, [#allocation3]
    $region5: #{tpu_custom_call.1} parent=1 // pred_fallthru
      _
    // Predicated region
    $region6: #{tpu_custom_call.1} parent=1 // pred_check
      _
    $region7: #{tpu_custom_call.1} parent=1 // pred_check_branch
      %22 = sbr.rel (0) target = $region9
    $region8: #{tpu_custom_call.1} parent=1 // pred_region
      %s24 = ssub.s32 1024, 1024
      %25 = vsyncadd [#allocation6], %s24
      %s26 = sshll.u32 [#allocation5], 4
      %s27 = int_to_ptr.vmem [resolvable:$true] %s26
      %32 = dma.hbm_to_vmem [thread:$0]  %s1, 1024, %s27, [#allocation6], 256, 256, 16
    $region9: #{tpu_custom_call.1} parent=1 // pred_fallthru
      _
    // Predicated region
    $region10: #{tpu_custom_call.1} parent=1 // pred_check
      _
    $region11: #{tpu_custom_call.1} parent=1 // pred_check_branch
      %34 = sbr.rel (0) target = $region13
    $region12: #{tpu_custom_call.1} parent=1 // pred_region
      _
    $region13: #{tpu_custom_call.1} parent=1 // pred_fallthru
      _
    // Predicated region
    $region14: #{tpu_custom_call.1} parent=1 // pred_check
      _
    $region15: #{tpu_custom_call.1} parent=1 // pred_check_branch
      %36 = sbr.rel (0) target = $region17
    $region16: #{tpu_custom_call.1} parent=1 // pred_region
      %37 = dma.done [#allocation3], 32
    $region17: #{tpu_custom_call.1} parent=1 // pred_fallthru
      _
    // Predicated region
    $region18: #{tpu_custom_call.1} parent=1 // pred_check
      _
    $region19: #{tpu_custom_call.1} parent=1 // pred_check_branch
      %39 = sbr.rel (0) target = $region21
    $region20: #{tpu_custom_call.1} parent=1 // pred_region
      %40 = dma.done [#allocation6], 1024
    $region21: #{tpu_custom_call.1} parent=1 // pred_fallthru
      _
    %v42 = vld [vmem:[#allocation2] sm:$0x3]
    %v43 = vpack.c.bf16 %v42, %v42
    %v44 = vld [vmem:[#allocation5] sm:$0xff]
    %v45 = vld [vmem:[#allocation5 + $0x8] sm:$0xff]
    %v46 = vld [vmem:[#allocation5 + $0x10] sm:$0xff]
    %v47 = vld [vmem:[#allocation5 + $0x18] sm:$0xff]
    %v48 = vld [vmem:[#allocation5 + $0x20] sm:$0xff]
    %v49 = vld [vmem:[#allocation5 + $0x28] sm:$0xff]
    %v50 = vld [vmem:[#allocation5 + $0x30] sm:$0xff]
    %v51 = vld [vmem:[#allocation5 + $0x38] sm:$0xff]
    %v52 = vpack.c.bf16 %v46, %v44
    %v53 = vpack.c.bf16 %v47, %v45
    %v54 = vpack.c.bf16 %v50, %v48
    %v55 = vpack.c.bf16 %v51, %v49
    %v56 = vld [vmem:[%s2] sm:$0x3]
    %v58 = vlaneseq
    %v59 = vshrl.u32 %v58, 7
    %v60 = vsub.s32 0, %v59
    %v61 = vrot.slane %v56, %v60
    %v62 = vlaneseq
    %v63 = vshrl.u32 %v62, 7
    %v64 = vsub.s32 1, %v63
    %v65 = vrot.slane %v56, %v64
    %vm68 = vcmask 261120
    %v70 = vsel %vm68, %v43, 0
    %72 = vmatprep.subr.bf16.mxu0 0
    %73 = vmatpush1.bf16.msra.mxu0 0
    %74 = vmatprep.subr.bf16.mxu0 0
    %75 = vmatpush1.bf16.msra.mxu0 0
    %76 = vmatprep.subr.bf16.mxu0 0
    %77 = vmatpush1.bf16.msra.mxu0 0
    %78 = vmatprep.subr.bf16.mxu0 0
    %79 = vmatpush1.bf16.msra.mxu0 0
    %80 = vmatprep.subr.bf16.mxu0 0
    %81 = vmatpush1.bf16.msra.mxu0 0
    %82 = vmatprep.subr.bf16.mxu0 0
    %83 = vmatpush1.bf16.msra.mxu0 0
    %84 = vmatprep.subr.bf16.mxu0 %v55
    %85 = vmatpush1.bf16.msra.mxu0 %v54
    %86 = vmatprep.subr.bf16.mxu0 %v53
    %87 = vmatpush1.bf16.msra.mxu0 %v52
    %88 = vmatprep.subr.bf16.mxu0 0
    %89 = vmatpush2.bf16.msra.mxu0 0
    %90 = vmatprep.subr.bf16.mxu0 0
    %91 = vmatpush2.bf16.msra.mxu0 0
    %92 = vmatprep.subr.bf16.mxu0 0
    %93 = vmatpush2.bf16.msra.mxu0 0
    %94 = vmatprep.subr.bf16.mxu0 0
    %95 = vmatpush2.bf16.msra.mxu0 0
    %96 = vmatprep.subr.bf16.mxu0 0
    %97 = vmatpush2.bf16.msra.mxu0 0
    %98 = vmatprep.subr.bf16.mxu0 0
    %99 = vmatpush2.bf16.msra.mxu0 0
    %100 = vmatprep.subr.bf16.mxu0 0
    %101 = vmatpush2.bf16.msra.mxu0 0
    %102 = vmatprep.subr.bf16.mxu0 0
    %103 = vmatpush2.bf16.msra.mxu0 0
    %104 = vmatprep.mubr.bf16.mxu0 0
    %105 = vmatmul.mubr.bf16.gmra.mxu0 %v70
    %v106 = vpop.f32.mrf.mxu0
    %v107 = vadd.f32 %v61, %v106
    %v108 = vpop.f32.mrf.mxu0
    %v109 = vadd.f32 %v65, %v108
    %v110 = vpop.f32.mrf.mxu0
    %v111 = vpop.f32.mrf.mxu0
    %112 = vdwg.mxu0
    %114 = vrot.lane.b32.xlu0 %v107, 112
    %v115 = vpop.permute.xlu0 %114
    %117 = vrot.lane.b32.xlu0 %v107, 96
    %v118 = vpop.permute.xlu0 %117
    %120 = vrot.lane.b32.xlu0 %v107, 80
    %v121 = vpop.permute.xlu0 %120
    %123 = vrot.lane.b32.xlu0 %v107, 64
    %v124 = vpop.permute.xlu0 %123
    %126 = vrot.lane.b32.xlu0 %v107, 48
    %v127 = vpop.permute.xlu0 %126
    %129 = vrot.lane.b32.xlu0 %v107, 32
    %v130 = vpop.permute.xlu0 %129
    %132 = vrot.lane.b32.xlu0 %v107, 16
    %v133 = vpop.permute.xlu0 %132
    %136 = vrot.lane.b32.xlu0 %v109, 112
    %v137 = vpop.permute.xlu0 %136
    %139 = vrot.lane.b32.xlu0 %v109, 96
    %v140 = vpop.permute.xlu0 %139
    %142 = vrot.lane.b32.xlu0 %v109, 80
    %v143 = vpop.permute.xlu0 %142
    %145 = vrot.lane.b32.xlu0 %v109, 64
    %v146 = vpop.permute.xlu0 %145
    %148 = vrot.lane.b32.xlu0 %v109, 48
    %v149 = vpop.permute.xlu0 %148
    %151 = vrot.lane.b32.xlu0 %v109, 32
    %v152 = vpop.permute.xlu0 %151
    %154 = vrot.lane.b32.xlu0 %v109, 16
    %v155 = vpop.permute.xlu0 %154
    %v157 = vcombine.low %v107, %v118
    %v159 = vunpack.c.l.s4 1983009808
    %v160 = vunpack.c.0.s8 %v159
    %v161 = vlaneseq
    %v162 = vshrl.u32 %v161, 7
    %v163 = vsub.s32 %v160, %v162
    %v164 = vrot.slane %v157, %v163
    %v165 = vcombine.low %v115, %v121
    %v167 = vunpack.c.l.s4 1983009808
    %v168 = vunpack.c.0.s8 %v167
    %v169 = vlaneseq
    %v170 = vshrl.u32 %v169, 7
    %v171 = vsub.s32 %v168, %v170
    %v172 = vrot.slane %v165, %v171
    %v173 = vcombine.low %v124, %v130
    %v175 = vunpack.c.l.s4 1983009808
    %v176 = vunpack.c.0.s8 %v175
    %v177 = vlaneseq
    %v178 = vshrl.u32 %v177, 7
    %v179 = vsub.s32 %v176, %v178
    %v180 = vrot.slane %v173, %v179
    %v181 = vcombine.low %v127, %v133
    %v183 = vunpack.c.l.s4 1983009808
    %v184 = vunpack.c.0.s8 %v183
    %v185 = vlaneseq
    %v186 = vshrl.u32 %v185, 7
    %v187 = vsub.s32 %v184, %v186
    %v188 = vrot.slane %v181, %v187
    %v189 = vcombine.low %v164, %v172
    %v191 = vunpack.c.l.s4 1934713408
    %v192 = vunpack.c.0.s8 %v191
    %v193 = vlaneseq
    %v194 = vshrl.u32 %v193, 7
    %v195 = vsub.s32 %v192, %v194
    %v196 = vrot.slane %v189, %v195
    %v197 = vcombine.low %v180, %v188
    %v199 = vunpack.c.l.s4 1934713408
    %v200 = vunpack.c.0.s8 %v199
    %v201 = vlaneseq
    %v202 = vshrl.u32 %v201, 7
    %v203 = vsub.s32 %v200, %v202
    %v204 = vrot.slane %v197, %v203
    %v205 = vcombine.low %v196, %v204
    %v206 = vcombine.high %v196, %v204
    %v207 = vcombine.low %v109, %v140
    %v209 = vunpack.c.l.s4 1983009808
    %v210 = vunpack.c.0.s8 %v209
    %v211 = vlaneseq
    %v212 = vshrl.u32 %v211, 7
    %v213 = vsub.s32 %v210, %v212
    %v214 = vrot.slane %v207, %v213
    %v215 = vcombine.low %v137, %v143
    %v217 = vunpack.c.l.s4 1983009808
    %v218 = vunpack.c.0.s8 %v217
    %v219 = vlaneseq
    %v220 = vshrl.u32 %v219, 7
    %v221 = vsub.s32 %v218, %v220
    %v222 = vrot.slane %v215, %v221
    %v223 = vcombine.low %v146, %v152
    %v225 = vunpack.c.l.s4 1983009808
    %v226 = vunpack.c.0.s8 %v225
    %v227 = vlaneseq
    %v228 = vshrl.u32 %v227, 7
    %v229 = vsub.s32 %v226, %v228
    %v230 = vrot.slane %v223, %v229
    %v231 = vcombine.low %v149, %v155
    %v233 = vunpack.c.l.s4 1983009808
    %v234 = vunpack.c.0.s8 %v233
    %v235 = vlaneseq
    %v236 = vshrl.u32 %v235, 7
    %v237 = vsub.s32 %v234, %v236
    %v238 = vrot.slane %v231, %v237
    %v239 = vcombine.low %v214, %v222
    %v241 = vunpack.c.l.s4 1934713408
    %v242 = vunpack.c.0.s8 %v241
    %v243 = vlaneseq
    %v244 = vshrl.u32 %v243, 7
    %v245 = vsub.s32 %v242, %v244
    %v246 = vrot.slane %v239, %v245
    %v247 = vcombine.low %v230, %v238
    %v249 = vunpack.c.l.s4 1934713408
    %v250 = vunpack.c.0.s8 %v249
    %v251 = vlaneseq
    %v252 = vshrl.u32 %v251, 7
    %v253 = vsub.s32 %v250, %v252
    %v254 = vrot.slane %v247, %v253
    %v255 = vcombine.low %v246, %v254
    %v256 = vcombine.high %v246, %v254
    %vm257 = vcmask 130048
    %v259 = vsel %vm257, %v205, 0
    %v262 = vsel %vm257, %v255, 0
    %264 = vmatprep.subr.mxu0 0.0
    %265 = vmatpush1.xpose.msra.mxu0 0.0
    %266 = vmatprep.subr.mxu0 0.0
    %267 = vmatpush1.xpose.msra.mxu0 0.0
    %268 = vmatprep.subr.mxu0 0.0
    %269 = vmatpush1.xpose.msra.mxu0 0.0
    %270 = vmatprep.subr.mxu0 0.0
    %271 = vmatpush1.xpose.msra.mxu0 0.0
    %272 = vmatprep.subr.mxu0 0.0
    %273 = vmatpush1.xpose.msra.mxu0 0.0
    %274 = vmatprep.subr.mxu0 0.0
    %275 = vmatpush1.xpose.msra.mxu0 0.0
    %276 = vmatprep.subr.mxu0 0.0
    %277 = vmatpush1.xpose.msra.mxu0 0.0
    %278 = vmatprep.subr.mxu0 0.0
    %279 = vmatpush1.xpose.msra.mxu0 0.0
    %280 = vmatprep.subr.mxu0 0.0
    %281 = vmatpush1.xpose.msra.mxu0 0.0
    %282 = vmatprep.subr.mxu0 0.0
    %283 = vmatpush1.xpose.msra.mxu0 0.0
    %284 = vmatprep.subr.mxu0 0.0
    %285 = vmatpush1.xpose.msra.mxu0 0.0
    %286 = vmatprep.subr.mxu0 0.0
    %287 = vmatpush1.xpose.msra.mxu0 0.0
    %288 = vmatprep.subr.mxu0 0.0
    %289 = vmatpush1.xpose.msra.mxu0 0.0
    %290 = vmatprep.subr.mxu0 0.0
    %291 = vmatpush1.xpose.msra.mxu0 0.0
    %292 = vmatprep.subr.mxu0 0.0
    %293 = vmatpush1.xpose.msra.mxu0 %v262
    %294 = vmatprep.subr.mxu0 0.0
    %295 = vmatpush1.xpose.msra.mxu0 %v259
    %296 = vmatprep.subr.mxu0 0.0
    %297 = vmatpush2.xpose.msra.mxu0 0.0
    %298 = vmatprep.subr.mxu0 0.0
    %299 = vmatpush2.xpose.msra.mxu0 0.0
    %300 = vmatprep.subr.mxu0 0.0
    %301 = vmatpush2.xpose.msra.mxu0 0.0
    %302 = vmatprep.subr.mxu0 0.0
    %303 = vmatpush2.xpose.msra.mxu0 0.0
    %304 = vmatprep.subr.mxu0 0.0
    %305 = vmatpush2.xpose.msra.mxu0 0.0
    %306 = vmatprep.subr.mxu0 0.0
    %307 = vmatpush2.xpose.msra.mxu0 0.0
    %308 = vmatprep.subr.mxu0 0.0
    %309 = vmatpush2.xpose.msra.mxu0 0.0
    %310 = vmatprep.subr.mxu0 0.0
    %311 = vmatpush2.xpose.msra.mxu0 0.0
    %312 = vmatprep.subr.mxu0 0.0
    %313 = vmatpush2.xpose.msra.mxu0 0.0
    %314 = vmatprep.subr.mxu0 0.0
    %315 = vmatpush2.xpose.msra.mxu0 0.0
    %316 = vmatprep.subr.mxu0 0.0
    %317 = vmatpush2.xpose.msra.mxu0 0.0
    %318 = vmatprep.subr.mxu0 0.0
    %319 = vmatpush2.xpose.msra.mxu0 0.0
    %320 = vmatprep.subr.mxu0 0.0
    %321 = vmatpush2.xpose.msra.mxu0 0.0
    %322 = vmatprep.subr.mxu0 0.0
    %323 = vmatpush2.xpose.msra.mxu0 0.0
    %324 = vmatprep.subr.mxu0 0.0
    %325 = vmatpush2.xpose.msra.mxu0 0.0
    %326 = vmatprep.subr.mxu0 0.0
    %327 = vmatpush2.xpose.msra.mxu0 0.0
    %328 = vmatprep.mubr.f32.mxu0 0.0
    %329 = vmatmul.mubr.f32.gmra.mxu0 %v259
    %v330 = vpop.f32.mrf.mxu0
    %v331 = vadd.f32 0.0, %v330
    %v332 = vpop.f32.mrf.mxu0
    %333 = vmatprep.mubr.f32.mxu0 0.0
    %334 = vmatmul.mubr.f32.gmra.mxu0 %v262
    %v335 = vpop.f32.mrf.mxu0
    %v336 = vadd.f32 0.0, %v335
    %v337 = vpop.f32.mrf.mxu0
    %338 = vdwg.mxu0
    %v340 = vsel %vm257, %v206, 0
    %v343 = vsel %vm257, %v256, 0
    %345 = vmatprep.subr.mxu0 0.0
    %346 = vmatpush1.xpose.msra.mxu0 0.0
    %347 = vmatprep.subr.mxu0 0.0
    %348 = vmatpush1.xpose.msra.mxu0 0.0
    %349 = vmatprep.subr.mxu0 0.0
    %350 = vmatpush1.xpose.msra.mxu0 0.0
    %351 = vmatprep.subr.mxu0 0.0
    %352 = vmatpush1.xpose.msra.mxu0 0.0
    %353 = vmatprep.subr.mxu0 0.0
    %354 = vmatpush1.xpose.msra.mxu0 0.0
    %355 = vmatprep.subr.mxu0 0.0
    %356 = vmatpush1.xpose.msra.mxu0 0.0
    %357 = vmatprep.subr.mxu0 0.0
    %358 = vmatpush1.xpose.msra.mxu0 0.0
    %359 = vmatprep.subr.mxu0 0.0
    %360 = vmatpush1.xpose.msra.mxu0 0.0
    %361 = vmatprep.subr.mxu0 0.0
    %362 = vmatpush1.xpose.msra.mxu0 0.0
    %363 = vmatprep.subr.mxu0 0.0
    %364 = vmatpush1.xpose.msra.mxu0 0.0
    %365 = vmatprep.subr.mxu0 0.0
    %366 = vmatpush1.xpose.msra.mxu0 0.0
    %367 = vmatprep.subr.mxu0 0.0
    %368 = vmatpush1.xpose.msra.mxu0 0.0
    %369 = vmatprep.subr.mxu0 0.0
    %370 = vmatpush1.xpose.msra.mxu0 0.0
    %371 = vmatprep.subr.mxu0 0.0
    %372 = vmatpush1.xpose.msra.mxu0 0.0
    %373 = vmatprep.subr.mxu0 0.0
    %374 = vmatpush1.xpose.msra.mxu0 %v343
    %375 = vmatprep.subr.mxu0 0.0
    %376 = vmatpush1.xpose.msra.mxu0 %v340
    %377 = vmatprep.subr.mxu0 0.0
    %378 = vmatpush2.xpose.msra.mxu0 0.0
    %379 = vmatprep.subr.mxu0 0.0
    %380 = vmatpush2.xpose.msra.mxu0 0.0
    %381 = vmatprep.subr.mxu0 0.0
    %382 = vmatpush2.xpose.msra.mxu0 0.0
    %383 = vmatprep.subr.mxu0 0.0
    %384 = vmatpush2.xpose.msra.mxu0 0.0
    %385 = vmatprep.subr.mxu0 0.0
    %386 = vmatpush2.xpose.msra.mxu0 0.0
    %387 = vmatprep.subr.mxu0 0.0
    %388 = vmatpush2.xpose.msra.mxu0 0.0
    %389 = vmatprep.subr.mxu0 0.0
    %390 = vmatpush2.xpose.msra.mxu0 0.0
    %391 = vmatprep.subr.mxu0 0.0
    %392 = vmatpush2.xpose.msra.mxu0 0.0
    %393 = vmatprep.subr.mxu0 0.0
    %394 = vmatpush2.xpose.msra.mxu0 0.0
    %395 = vmatprep.subr.mxu0 0.0
    %396 = vmatpush2.xpose.msra.mxu0 0.0
    %397 = vmatprep.subr.mxu0 0.0
    %398 = vmatpush2.xpose.msra.mxu0 0.0
    %399 = vmatprep.subr.mxu0 0.0
    %400 = vmatpush2.xpose.msra.mxu0 0.0
    %401 = vmatprep.subr.mxu0 0.0
    %402 = vmatpush2.xpose.msra.mxu0 0.0
    %403 = vmatprep.subr.mxu0 0.0
    %404 = vmatpush2.xpose.msra.mxu0 0.0
    %405 = vmatprep.subr.mxu0 0.0
    %406 = vmatpush2.xpose.msra.mxu0 0.0
    %407 = vmatprep.subr.mxu0 0.0
    %408 = vmatpush2.xpose.msra.mxu0 0.0
    %409 = vmatprep.mubr.f32.mxu0 0.0
    %410 = vmatmul.mubr.f32.gmra.mxu0 %v340
    %v411 = vpop.f32.mrf.mxu0
    %v412 = vadd.f32 0.0, %v411
    %v413 = vpop.f32.mrf.mxu0
    %414 = vmatprep.mubr.f32.mxu0 0.0
    %415 = vmatmul.mubr.f32.gmra.mxu0 %v343
    %v416 = vpop.f32.mrf.mxu0
    %v417 = vadd.f32 0.0, %v416
    %v418 = vpop.f32.mrf.mxu0
    %419 = vdwg.mxu0
    %v420 = vcombine.high %v331, 0.0
    %v422 = vunpack.c.l.s4 1983009808
    %v423 = vunpack.c.0.s8 %v422
    %v424 = vlaneseq
    %v425 = vshrl.u32 %v424, 7
    %v426 = vsub.s32 %v423, %v425
    %v427 = vrot.slane %v331, %v426
    %v429 = vunpack.c.l.s4 1983009808
    %v430 = vunpack.c.0.s8 %v429
    %v431 = vlaneseq
    %v432 = vshrl.u32 %v431, 7
    %v433 = vsub.s32 %v430, %v432
    %v434 = vrot.slane %v420, %v433
    %v435 = vcombine.high %v412, 0.0
    %v437 = vunpack.c.l.s4 1983009808
    %v438 = vunpack.c.0.s8 %v437
    %v439 = vlaneseq
    %v440 = vshrl.u32 %v439, 7
    %v441 = vsub.s32 %v438, %v440
    %v442 = vrot.slane %v412, %v441
    %v444 = vunpack.c.l.s4 1983009808
    %v445 = vunpack.c.0.s8 %v444
    %v446 = vlaneseq
    %v447 = vshrl.u32 %v446, 7
    %v448 = vsub.s32 %v445, %v447
    %v449 = vrot.slane %v435, %v448
    %v450 = vcombine.low %v427, %v442
    %v451 = vcombine.high %v427, %v442
    %v453 = vunpack.c.l.s4 1934713408
    %v454 = vunpack.c.0.s8 %v453
    %v455 = vlaneseq
    %v456 = vshrl.u32 %v455, 7
    %v457 = vsub.s32 %v454, %v456
    %v458 = vrot.slane %v450, %v457
    %v460 = vunpack.c.l.s4 1934713408
    %v461 = vunpack.c.0.s8 %v460
    %v462 = vlaneseq
    %v463 = vshrl.u32 %v462, 7
    %v464 = vsub.s32 %v461, %v463
    %v465 = vrot.slane %v451, %v464
    %v466 = vcombine.low %v434, %v449
    %v467 = vcombine.high %v434, %v449
    %v469 = vunpack.c.l.s4 1934713408
    %v470 = vunpack.c.0.s8 %v469
    %v471 = vlaneseq
    %v472 = vshrl.u32 %v471, 7
    %v473 = vsub.s32 %v470, %v472
    %v474 = vrot.slane %v466, %v473
    %v476 = vunpack.c.l.s4 1934713408
    %v477 = vunpack.c.0.s8 %v476
    %v478 = vlaneseq
    %v479 = vshrl.u32 %v478, 7
    %v480 = vsub.s32 %v477, %v479
    %v481 = vrot.slane %v467, %v480
    %v482 = vcombine.high %v458, 0.0
    %v483 = vcombine.high %v465, 0.0
    %v484 = vcombine.high %v474, 0.0
    %v485 = vcombine.high %v481, 0.0
    %v486 = vcombine.high %v336, 0.0
    %v488 = vunpack.c.l.s4 1983009808
    %v489 = vunpack.c.0.s8 %v488
    %v490 = vlaneseq
    %v491 = vshrl.u32 %v490, 7
    %v492 = vsub.s32 %v489, %v491
    %v493 = vrot.slane %v336, %v492
    %v495 = vunpack.c.l.s4 1983009808
    %v496 = vunpack.c.0.s8 %v495
    %v497 = vlaneseq
    %v498 = vshrl.u32 %v497, 7
    %v499 = vsub.s32 %v496, %v498
    %v500 = vrot.slane %v486, %v499
    %v501 = vcombine.high %v417, 0.0
    %v503 = vunpack.c.l.s4 1983009808
    %v504 = vunpack.c.0.s8 %v503
    %v505 = vlaneseq
    %v506 = vshrl.u32 %v505, 7
    %v507 = vsub.s32 %v504, %v506
    %v508 = vrot.slane %v417, %v507
    %v510 = vunpack.c.l.s4 1983009808
    %v511 = vunpack.c.0.s8 %v510
    %v512 = vlaneseq
    %v513 = vshrl.u32 %v512, 7
    %v514 = vsub.s32 %v511, %v513
    %v515 = vrot.slane %v501, %v514
    %v516 = vcombine.low %v493, %v508
    %v517 = vcombine.high %v493, %v508
    %v519 = vunpack.c.l.s4 1934713408
    %v520 = vunpack.c.0.s8 %v519
    %v521 = vlaneseq
    %v522 = vshrl.u32 %v521, 7
    %v523 = vsub.s32 %v520, %v522
    %v524 = vrot.slane %v516, %v523
    %v526 = vunpack.c.l.s4 1934713408
    %v527 = vunpack.c.0.s8 %v526
    %v528 = vlaneseq
    %v529 = vshrl.u32 %v528, 7
    %v530 = vsub.s32 %v527, %v529
    %v531 = vrot.slane %v517, %v530
    %v532 = vcombine.low %v500, %v515
    %v533 = vcombine.high %v500, %v515
    %v535 = vunpack.c.l.s4 1934713408
    %v536 = vunpack.c.0.s8 %v535
    %v537 = vlaneseq
    %v538 = vshrl.u32 %v537, 7
    %v539 = vsub.s32 %v536, %v538
    %v540 = vrot.slane %v532, %v539
    %v542 = vunpack.c.l.s4 1934713408
    %v543 = vunpack.c.0.s8 %v542
    %v544 = vlaneseq
    %v545 = vshrl.u32 %v544, 7
    %v546 = vsub.s32 %v543, %v545
    %v547 = vrot.slane %v533, %v546
    %v548 = vcombine.high %v524, 0.0
    %v549 = vcombine.high %v531, 0.0
    %v550 = vcombine.high %v540, 0.0
    %v551 = vcombine.high %v547, 0.0
    %553 = vrot.lane.b32.xlu0 %v482, 16
    %v554 = vpop.permute.xlu0 %553
    %557 = vrot.lane.b32.xlu0 %v465, 32
    %v558 = vpop.permute.xlu0 %557
    %561 = vrot.lane.b32.xlu0 %v483, 48
    %v562 = vpop.permute.xlu0 %561
    %565 = vrot.lane.b32.xlu0 %v474, 64
    %v566 = vpop.permute.xlu0 %565
    %569 = vrot.lane.b32.xlu0 %v484, 80
    %v570 = vpop.permute.xlu0 %569
    %573 = vrot.lane.b32.xlu0 %v481, 96
    %v574 = vpop.permute.xlu0 %573
    %577 = vrot.lane.b32.xlu0 %v485, 112
    %v578 = vpop.permute.xlu0 %577
    %581 = vrot.lane.b32.xlu0 %v548, 16
    %v582 = vpop.permute.xlu0 %581
    %585 = vrot.lane.b32.xlu0 %v531, 32
    %v586 = vpop.permute.xlu0 %585
    %589 = vrot.lane.b32.xlu0 %v549, 48
    %v590 = vpop.permute.xlu0 %589
    %593 = vrot.lane.b32.xlu0 %v540, 64
    %v594 = vpop.permute.xlu0 %593
    %597 = vrot.lane.b32.xlu0 %v550, 80
    %v598 = vpop.permute.xlu0 %597
    %601 = vrot.lane.b32.xlu0 %v547, 96
    %v602 = vpop.permute.xlu0 %601
    %605 = vrot.lane.b32.xlu0 %v551, 112
    %v606 = vpop.permute.xlu0 %605
    %v608 = vsel %vm257, %v458, %v554
    %v609 = vsel %vm68, %v608, %v558
    %vm610 = vcmask 392192
    %v611 = vsel %vm610, %v609, %v562
    %vm612 = vcmask 523264
    %v613 = vsel %vm612, %v611, %v566
    %vm614 = vcmask 654336
    %v615 = vsel %vm614, %v613, %v570
    %vm616 = vcmask 785408
    %v617 = vsel %vm616, %v615, %v574
    %vm618 = vcmask 916480
    %v619 = vsel %vm618, %v617, %v578
    %v620 = vsel %vm257, %v524, %v582
    %v621 = vsel %vm68, %v620, %v586
    %v622 = vsel %vm610, %v621, %v590
    %v623 = vsel %vm612, %v622, %v594
    %v624 = vsel %vm614, %v623, %v598
    %v625 = vsel %vm616, %v624, %v602
    %v626 = vsel %vm618, %v625, %v606
    %v629 = vcombine.low %v619, %v626
    %v631 = vunpack.c.l.s4 1983009808
    %v632 = vunpack.c.0.s8 %v631
    %v633 = vlaneseq
    %v634 = vshrl.u32 %v633, 7
    %v635 = vsub.s32 %v632, %v634
    %v636 = vrot.slane %v629, %v635
    %638 = vst [vmem:[#allocation7] sm:$0xf] %v636
    // Predicated region
    $region22: #{tpu_custom_call.1} parent=1 // pred_check
      _
    $region23: #{tpu_custom_call.1} parent=1 // pred_check_branch
      %640 = sbr.rel (0) target = $region25
    $region24: #{tpu_custom_call.1} parent=1 // pred_region
      %s642 = ssub.s32 64, 64
      %643 = vsyncadd [#allocation4], %s642
      %s645 = sshll.u32 [#allocation7], 4
      %s646 = int_to_ptr.vmem [resolvable:$true] %s645
      %648 = dma.vmem_to_hbm [thread:$0]  %s646, 64, %s3, [#allocation4]
    $region25: #{tpu_custom_call.1} parent=1 // pred_fallthru
      _
    // Predicated region
    $region26: #{tpu_custom_call.1} parent=1 // pred_check
      _
    $region27: #{tpu_custom_call.1} parent=1 // pred_check_branch
      %650 = sbr.rel (0) target = $region29
    $region28: #{tpu_custom_call.1} parent=1 // pred_region
      %651 = dma.done [#allocation4], 64
    $region29: #{tpu_custom_call.1} parent=1 // pred_fallthru
      _
    %652 = vsyncpa [#allocation3], 1
    %653 = vsyncpa [#allocation6], 1
    %654 = vsyncpa [#allocation4], 1

</llo_original>
